<compile_context>
chip_gen: v7x
topology: tpu7x:2x2x1
jax: 0.10.0
libtpu: 0.0.40
codegen_flags: <defaults>
</compile_context>

<pallas_src>
import functools

import jax
import jax.numpy as jnp
from jax import lax
from jax.experimental import pallas as pl
from jax.experimental.pallas import tpu as pltpu


_LANE = 128
_SUBLANE = 8
_UNROLL_CHUNKS = 16          # static-unroll the phase-1 chunk sweep up to this
_FORI_UNROLL = 8             # unroll factor for the fori_loop sweep


# --------------------------------------------------------------------------- #
# Kernel
# --------------------------------------------------------------------------- #
def _kmax_kernel(x_ref, o_ref, *, k: int, num_chunks: int, comp_dtype):
    """o_ref[r, 0] = sum of the k largest values of x_ref[r, :] (in f32)."""
    rows = x_ref.shape[0]
    neg = float(jnp.finfo(comp_dtype).min)

    def load_chunk(start):
        return x_ref[:, pl.ds(start, _LANE)].astype(comp_dtype)

    def insert(cands, v):
        # Bubble-insert chunk `v` into the per-lane sorted candidate list.
        out = []
        for cand in cands:
            hi = jnp.maximum(cand, v)
            v = jnp.minimum(cand, v)
            out.append(hi)
        return tuple(out)

    if num_chunks > k:
        # Phase 1: one sweep over the row keeping, per lane slot, the k largest
        # values seen so far. The global top-k of a row is (value-wise) a
        # sub-multiset of these k*128 candidates, so phase 2 over the candidate
        # tuple gives the exact top-k sum.
        init = tuple(jnp.full((rows, _LANE), neg, comp_dtype) for _ in range(k))
        if num_chunks <= _UNROLL_CHUNKS:
            cands = init
            for ci in range(num_chunks):
                cands = insert(cands, load_chunk(ci * _LANE))
        else:
            def body(ci, cands):
                start = pl.multiple_of(ci * _LANE, _LANE)
                return insert(cands, load_chunk(start))
            cands = lax.fori_loop(0, num_chunks, body, init,
                                  unroll=_FORI_UNROLL)
    else:
        # The candidate set would not be smaller than the row itself: use the
        # raw lane chunks as the candidate tuple (still no concat materialized).
        cands = tuple(load_chunk(ci * _LANE) for ci in range(num_chunks))

    cands = list(cands)
    n_cand = len(cands)

    def lane_max(arrs):
        m = arrs[0]
        for a in arrs[1:]:
            m = jnp.maximum(m, a)
        return m

    if k == 1:
        m_lane = lane_max(cands).astype(jnp.float32)
        o_ref[...] = jnp.max(m_lane, axis=-1, keepdims=True).astype(o_ref.dtype)
        return

    # Phase 2: exact top-k sum over the candidate tuple.  Equality/count scheme
    # (take = min(#ties, remaining)) -- matches torch.topk + scatter semantics
    # (exactly k elements summed) without materializing a (rows, k*128) concat,
    # an int32 iota, or argmax + per-step full-slab rewrites.
    acc = jnp.zeros((rows, 1), jnp.float32)
    remaining = jnp.full((rows, 1), float(k), jnp.float32)
    for step in range(k):
        # Lane reduce runs in f32 (cheap, definitely supported); the max of the
        # comp_dtype values is exactly representable, so equality below is exact.
        m_row32 = jnp.max(lane_max(cands).astype(jnp.float32),
                          axis=-1, keepdims=True)                   # (rows, 1)
        m_row = m_row32.astype(comp_dtype)
        cnt_lane = jnp.zeros((rows, _LANE), jnp.float32)
        for j in range(n_cand):
            eq = cands[j] == m_row
            cnt_lane = cnt_lane + eq.astype(jnp.float32)
            if step < k - 1:
                cands[j] = jnp.where(eq, neg, cands[j])
        cnt = jnp.sum(cnt_lane, axis=-1, keepdims=True)              # (rows, 1)
        take = jnp.minimum(cnt, remaining)
        acc = acc + take * m_row32
        remaining = remaining - take

    o_ref[...] = acc.astype(o_ref.dtype)


# --------------------------------------------------------------------------- #
# Wrapper
# --------------------------------------------------------------------------- #
def _round_up(n: int, m: int) -> int:
    return ((n + m - 1) // m) * m


def _vmem_capacity_bytes() -> int:
    try:
        return int(pltpu.get_tpu_info().vmem_capacity_bytes)
    except Exception:
        return 64 * 1024 * 1024        # conservative (v7x-sized) fallback


def _device_kind() -> str:
    try:
        return jax.devices()[0].device_kind.lower()
    except Exception:
        return ""


def _num_tensorcores() -> int:
    kind = _device_kind()
    # v4 / v5p megacore and v7x expose 2 TensorCores per device; v5e/v6e have 1.
    return 2 if any(tag in kind for tag in ("v4", "v5p", "v7")) else 1


def _supports_bf16_vpu() -> bool:
    kind = _device_kind()
    # v5e has no bf16 VALU; keep the f32 compute path there.
    return not any(tag in kind for tag in ("v5e", "v5 lite", "v5lite"))


def global_kmax_pool2d(x: jax.Array, k: int = 1) -> jax.Array:
    """x: (B, C, H, W) -> (B, C), sum of the top-k spatial values per channel."""
    k = int(k)
    if k < 1:
        k = 1
    b, c, h, w = x.shape
    hw = h * w
    if k > hw:
        # mirror the (quirky) PyTorch module behaviour
        k = hw - 1
    k = max(k, 1)

    bc = b * c
    x2d = x.reshape(bc, hw)

    # Pad the lane (spatial) axis to a multiple of 128 with the dtype's most
    # negative value so padding never wins the top-k.
    hw_p = _round_up(hw, _LANE)
    if jnp.issubdtype(x.dtype, jnp.floating):
        pad_val = float(jnp.finfo(x.dtype).min)
    else:
        pad_val = int(jnp.iinfo(x.dtype).min)

    # bf16 compute path on bf16-VPU parts; f32 otherwise.
    # TODO(synk): integer inputs still run the compare/sum path in f32, so
    # |v| > 2^24 can round (documented, unchanged from the PyTorch-equivalent
    # behaviour we test here).
    if x.dtype == jnp.bfloat16 and _supports_bf16_vpu():
        comp_dtype = jnp.bfloat16
    else:
        comp_dtype = jnp.float32

    in_itemsize = jnp.dtype(x.dtype).itemsize
    comp_itemsize = jnp.dtype(comp_dtype).itemsize

    # Generation-aware VMEM budgets.  Peak ~= 2 * input tile (double buffer)
    # + (k + ~4) * rows * 128 * comp_itemsize candidate/temp slabs, which stays
    # well under the scoped limit below on every generation.
    vmem_cap = _vmem_capacity_bytes()
    vmem_limit = (3 * vmem_cap) // 4          # 96 MiB on v5e/v6e, 48 MiB on v7x
    tile_cap = vmem_cap // 8                  # per input buffer (Pallas double-buffers)
    scratch_cap = vmem_cap // 8               # candidates + phase-2 temporaries

    rows_input = max(1, tile_cap // (hw_p * in_itemsize))
    rows_scratch = max(1, scratch_cap // ((k + 4) * _LANE * comp_itemsize))
    row_tile = max(_SUBLANE,
                   (min(rows_input, rows_scratch) // _SUBLANE) * _SUBLANE)

    bc8 = _round_up(bc, _SUBLANE)
    row_tile = min(row_tile, bc8)

    # Only force a grid split on multi-TensorCore parts, where the "parallel"
    # axis is what megacore shards; on single-TC chips a split just adds
    # per-step overhead and halves each DMA.
    n_tc = _num_tensorcores()
    if n_tc > 1 and bc8 > _SUBLANE:
        per_core = _round_up(-(-bc8 // n_tc), _SUBLANE)
        row_tile = min(row_tile, max(_SUBLANE, per_core))

    bc_p = _round_up(bc8, row_tile)
    if (bc_p, hw_p) != (bc, hw):
        x2d = jnp.pad(x2d, ((0, bc_p - bc), (0, hw_p - hw)),
                      constant_values=pad_val)

    grid = (bc_p // row_tile,)
    num_chunks = hw_p // _LANE

    # TODO(synk): the (row_tile, 1) output block lowers to masked vst; a
    # lane-dense (1, row_tile) layout would need a sublane->lane relayout of the
    # per-row sums inside the kernel -- left as-is since the writeback is only
    # B*C values per call and negligible next to the B*C*H*W input stream.
    out2d = pl.pallas_call(
        functools.partial(_kmax_kernel, k=k, num_chunks=num_chunks,
                          comp_dtype=comp_dtype),
        out_shape=jax.ShapeDtypeStruct((bc_p, 1), jnp.float32),
        grid_spec=pltpu.PrefetchScalarGridSpec(
            num_scalar_prefetch=0,
            grid=grid,
            in_specs=[pl.BlockSpec((row_tile, hw_p), lambda i: (i, 0))],
            out_specs=pl.BlockSpec((row_tile, 1), lambda i: (i, 0)),
        ),
        compiler_params=pltpu.CompilerParams(
            dimension_semantics=("parallel",),
            vmem_limit_bytes=vmem_limit),
    )(x2d)

    return out2d[:bc].reshape(b, c).astype(x.dtype)


# --------------------------------------------------------------------------- #
# Reference + tests
# --------------------------------------------------------------------------- #
def _reference(x: jax.Array, k: int) -> jax.Array:
    b, c, h, w = x.shape
    flat = x.reshape(b, c, h * w).astype(jnp.float32)
    return lax.top_k(flat, k)[0].sum(-1)


def _check(shape, k, key, dtype=jnp.float32, atol=1e-5, rtol=1e-5):
    x = jax.random.normal(key, shape, dtype=jnp.float32).astype(dtype)
    y = global_kmax_pool2d(x, k=k)
    jax.block_until_ready(y)
    y_ref = _reference(x, k)
    assert y.shape == shape[:2], (y.shape, shape)
    assert jnp.allclose(y.astype(jnp.float32), y_ref, atol=atol, rtol=rtol), (
        shape, k, dtype, y, y_ref)


if __name__ == "__main__":
    key = jax.random.PRNGKey(0)
    keys = jax.random.split(key, 6)

    # Primary case (matches the module's typical small-shape usage).
    _check((2, 4, 16, 16), 3, keys[0])      # direct path (few lane chunks)
    _check((2, 4, 16, 16), 1, keys[1])      # k == 1 fast path (insert sweep)
    _check((2, 4, 32, 32), 3, keys[2])      # candidate path, static unroll
    _check((2, 3, 10, 20), 5, keys[3])      # odd shapes -> row/lane padding
    _check((1, 4, 48, 64), 2, keys[4])      # candidate path, fori_loop sweep
    _check((2, 4, 32, 32), 3, keys[5],      # bf16 compute path (v6e/v7x)
           dtype=jnp.bfloat16, atol=6e-2, rtol=2e-2)

    print("KERNEL_OK")
</pallas_src>

<mosaic_0001>
module attributes {stable_mosaic.version = 11 : i64} {
  func.func @_kmax_kernel(%arg0: i32, %arg1: memref<8x256xf32, #tpu.memory_space<vmem>>, %arg2: memref<8x1xf32, #tpu.memory_space<vmem>>) attributes {dimension_semantics = [#tpu.dimension_semantics<parallel>], iteration_bounds = array<i64: 1>, scalar_prefetch = 0 : i64, scratch_operands = 0 : i64, tpu.core_type = #tpu.core_type<tc>, window_params = [{transform_indices = @transform_0, window_bounds = array<i64: 8, 256>}, {transform_indices = @transform_1, window_bounds = array<i64: 8, 1>}]} {
    %c0 = arith.constant 0 : index
    %c0_0 = arith.constant 0 : index
    %0 = vector.load %arg1[%c0, %c0_0] : memref<8x256xf32, #tpu.memory_space<vmem>>, vector<8x128xf32>
    %c0_1 = arith.constant 0 : index
    %c128 = arith.constant 128 : index
    %1 = vector.load %arg1[%c0_1, %c128] : memref<8x256xf32, #tpu.memory_space<vmem>>, vector<8x128xf32>
    %cst = arith.constant 0.000000e+00 : f32
    %2 = vector.broadcast %cst : f32 to vector<8x1xf32>
    %cst_2 = arith.constant 3.000000e+00 : f32
    %3 = vector.broadcast %cst_2 : f32 to vector<8x1xf32>
    %4 = arith.maximumf %0, %1 : vector<8x128xf32>
    %cst_3 = arith.constant dense<0xFF800000> : vector<8xf32>
    %5 = vector.multi_reduction <maximumf>, %4, %cst_3 [1] : vector<8x128xf32> to vector<8xf32>
    %6 = vector.shape_cast %5 : vector<8xf32> to vector<8x1xf32>
    %cst_4 = arith.constant 0.000000e+00 : f32
    %7 = vector.broadcast %cst_4 : f32 to vector<8x128xf32>
    %8 = vector.broadcast %6 : vector<8x1xf32> to vector<8x128xf32>
    %9 = arith.cmpf oeq, %0, %8 : vector<8x128xf32>
    %10 = arith.extui %9 : vector<8x128xi1> to vector<8x128xi32>
    %11 = arith.sitofp %10 : vector<8x128xi32> to vector<8x128xf32>
    %12 = arith.addf %7, %11 : vector<8x128xf32>
    %cst_5 = arith.constant -3.40282347E+38 : f32
    %13 = vector.broadcast %cst_5 : f32 to vector<8x128xf32>
    %14 = arith.select %9, %13, %0 : vector<8x128xi1>, vector<8x128xf32>
    %15 = vector.broadcast %6 : vector<8x1xf32> to vector<8x128xf32>
    %16 = arith.cmpf oeq, %1, %15 : vector<8x128xf32>
    %17 = arith.extui %16 : vector<8x128xi1> to vector<8x128xi32>
    %18 = arith.sitofp %17 : vector<8x128xi32> to vector<8x128xf32>
    %19 = arith.addf %12, %18 : vector<8x128xf32>
    %cst_6 = arith.constant -3.40282347E+38 : f32
    %20 = vector.broadcast %cst_6 : f32 to vector<8x128xf32>
    %21 = arith.select %16, %20, %1 : vector<8x128xi1>, vector<8x128xf32>
    %cst_7 = arith.constant dense<0.000000e+00> : vector<8xf32>
    %22 = vector.multi_reduction <add>, %19, %cst_7 [1] : vector<8x128xf32> to vector<8xf32>
    %23 = vector.shape_cast %22 : vector<8xf32> to vector<8x1xf32>
    %24 = arith.minimumf %23, %3 : vector<8x1xf32>
    %25 = arith.mulf %24, %6 : vector<8x1xf32>
    %26 = arith.addf %2, %25 : vector<8x1xf32>
    %27 = arith.subf %3, %24 : vector<8x1xf32>
    %28 = arith.maximumf %14, %21 : vector<8x128xf32>
    %cst_8 = arith.constant dense<0xFF800000> : vector<8xf32>
    %29 = vector.multi_reduction <maximumf>, %28, %cst_8 [1] : vector<8x128xf32> to vector<8xf32>
    %30 = vector.shape_cast %29 : vector<8xf32> to vector<8x1xf32>
    %cst_9 = arith.constant 0.000000e+00 : f32
    %31 = vector.broadcast %cst_9 : f32 to vector<8x128xf32>
    %32 = vector.broadcast %30 : vector<8x1xf32> to vector<8x128xf32>
    %33 = arith.cmpf oeq, %14, %32 : vector<8x128xf32>
    %34 = arith.extui %33 : vector<8x128xi1> to vector<8x128xi32>
    %35 = arith.sitofp %34 : vector<8x128xi32> to vector<8x128xf32>
    %36 = arith.addf %31, %35 : vector<8x128xf32>
    %cst_10 = arith.constant -3.40282347E+38 : f32
    %37 = vector.broadcast %cst_10 : f32 to vector<8x128xf32>
    %38 = arith.select %33, %37, %14 : vector<8x128xi1>, vector<8x128xf32>
    %39 = vector.broadcast %30 : vector<8x1xf32> to vector<8x128xf32>
    %40 = arith.cmpf oeq, %21, %39 : vector<8x128xf32>
    %41 = arith.extui %40 : vector<8x128xi1> to vector<8x128xi32>
    %42 = arith.sitofp %41 : vector<8x128xi32> to vector<8x128xf32>
    %43 = arith.addf %36, %42 : vector<8x128xf32>
    %cst_11 = arith.constant -3.40282347E+38 : f32
    %44 = vector.broadcast %cst_11 : f32 to vector<8x128xf32>
    %45 = arith.select %40, %44, %21 : vector<8x128xi1>, vector<8x128xf32>
    %cst_12 = arith.constant dense<0.000000e+00> : vector<8xf32>
    %46 = vector.multi_reduction <add>, %43, %cst_12 [1] : vector<8x128xf32> to vector<8xf32>
    %47 = vector.shape_cast %46 : vector<8xf32> to vector<8x1xf32>
    %48 = arith.minimumf %47, %27 : vector<8x1xf32>
    %49 = arith.mulf %48, %30 : vector<8x1xf32>
    %50 = arith.addf %26, %49 : vector<8x1xf32>
    %51 = arith.subf %27, %48 : vector<8x1xf32>
    %52 = arith.maximumf %38, %45 : vector<8x128xf32>
    %cst_13 = arith.constant dense<0xFF800000> : vector<8xf32>
    %53 = vector.multi_reduction <maximumf>, %52, %cst_13 [1] : vector<8x128xf32> to vector<8xf32>
    %54 = vector.shape_cast %53 : vector<8xf32> to vector<8x1xf32>
    %cst_14 = arith.constant 0.000000e+00 : f32
    %55 = vector.broadcast %cst_14 : f32 to vector<8x128xf32>
    %56 = vector.broadcast %54 : vector<8x1xf32> to vector<8x128xf32>
    %57 = arith.cmpf oeq, %38, %56 : vector<8x128xf32>
    %58 = arith.extui %57 : vector<8x128xi1> to vector<8x128xi32>
    %59 = arith.sitofp %58 : vector<8x128xi32> to vector<8x128xf32>
    %60 = arith.addf %55, %59 : vector<8x128xf32>
    %61 = vector.broadcast %54 : vector<8x1xf32> to vector<8x128xf32>
    %62 = arith.cmpf oeq, %45, %61 : vector<8x128xf32>
    %63 = arith.extui %62 : vector<8x128xi1> to vector<8x128xi32>
    %64 = arith.sitofp %63 : vector<8x128xi32> to vector<8x128xf32>
    %65 = arith.addf %60, %64 : vector<8x128xf32>
    %cst_15 = arith.constant dense<0.000000e+00> : vector<8xf32>
    %66 = vector.multi_reduction <add>, %65, %cst_15 [1] : vector<8x128xf32> to vector<8xf32>
    %67 = vector.shape_cast %66 : vector<8xf32> to vector<8x1xf32>
    %68 = arith.minimumf %67, %51 : vector<8x1xf32>
    %69 = arith.mulf %68, %54 : vector<8x1xf32>
    %70 = arith.addf %50, %69 : vector<8x1xf32>
    %c0_16 = arith.constant 0 : index
    %c0_17 = arith.constant 0 : index
    %71 = vector.load %arg2[%c0_16, %c0_17] : memref<8x1xf32, #tpu.memory_space<vmem>>, vector<8x1xf32>
    tpu.vector_store %arg2[%c0_16, %c0_17], %70 {strides = array<i32>} : memref<8x1xf32, #tpu.memory_space<vmem>>, vector<8x1xf32>,
    return
  }
  func.func @transform_0(%arg0: i32) -> (i32, i32) {
    %c0_i32 = arith.constant 0 : i32
    %c0_i32_0 = arith.constant 0 : i32
    return %arg0, %c0_i32 : i32, i32
  }
  func.func @transform_1(%arg0: i32) -> (i32, i32) {
    %c0_i32 = arith.constant 0 : i32
    %c0_i32_0 = arith.constant 0 : i32
    return %arg0, %c0_i32 : i32, i32
  }
}

</mosaic_0001>

<llo_original>
// kernel: tpu_custom_call.1
$region0: #{tpu_custom_call.1}
  #allocation0 [shape = 'u32[]', space=smem, size = 0x4, offset = 0x4, fixed_abs, tag = 'smem constant byte address 0x4 - core index']
  #allocation1 [shape = 'u32[144,128]{1,0:T(1,128)}', space=vmem, size = 0x12000, scoped, tag = 'internal scratch']
  %s0 = inlined_call_operand.hbm [shape: f32[8,256], index: 0, kind: input, shape index: {}]
  %s1 = inlined_call_operand.vmem [shape: f32[8,1], index: 1, kind: output, shape index: {}]
  %s2 = sld [smem:[#allocation0]]
  $region18: #{tpu_custom_call.1} parent=0
    _
  %s4 = ssub.s32 1, %s2
  %s5 = scalar_select 0, %s4, %s2
  $region1: #{tpu_custom_call.1} parent=0
    #allocation2 [shape = 'u8[8192]{0}', space=vmem, size = 0x2000, scoped, tag = 'input window, operand 0, single buffered']
    #allocation3 [shape = 's32[1]{0}', space=sflag, size = 0x4, scoped, tag = 'scoped memory for tpu_custom_call.1']
    %6 = vsyncpa [#allocation3], 0
    // Predicated region
    $region2: #{tpu_custom_call.1} parent=1 // pred_check
      _
    $region3: #{tpu_custom_call.1} parent=1 // pred_check_branch
      %8 = sbr.rel (0) target = $region5
    $region4: #{tpu_custom_call.1} parent=1 // pred_region
      %s10 = ssub.s32 256, 256
      %11 = vsyncadd [#allocation3], %s10
      %s13 = sshll.u32 [#allocation2], 4
      %s14 = int_to_ptr.vmem [resolvable:$true] %s13
      %16 = dma.hbm_to_vmem [thread:$0]  %s0, 256, %s14, [#allocation3]
    $region5: #{tpu_custom_call.1} parent=1 // pred_fallthru
      _
    // Predicated region
    $region6: #{tpu_custom_call.1} parent=1 // pred_check
      _
    $region7: #{tpu_custom_call.1} parent=1 // pred_check_branch
      %18 = sbr.rel (0) target = $region9
    $region8: #{tpu_custom_call.1} parent=1 // pred_region
      %19 = dma.done [#allocation3], 256
    $region9: #{tpu_custom_call.1} parent=1 // pred_fallthru
      _
    %v20 = vld [vmem:[#allocation2] sm:$0xff]
    %v21 = vld [vmem:[#allocation2 + $0x8] sm:$0xff]
    %v22 = vmax.f32 %v20, %v21
    %23 = vmax.xlane.f32.xlu0 %v22
    %v24 = vpop.xlane.xlu0 %23
    %vm25 = vcmp.eq.f32.partialorder %v20, %v24
    %v26 = vsel %vm25, 1, 0
    %v27 = vcvt.s32.f32 %v26
    %v28 = vadd.f32 %v27, 0.0
    %v29 = vsel %vm25, -3.4028235e+38, %v20
    %vm30 = vcmp.eq.f32.partialorder %v21, %v24
    %v31 = vsel %vm30, 1, 0
    %v32 = vcvt.s32.f32 %v31
    %v33 = vadd.f32 %v28, %v32
    %v34 = vsel %vm30, -3.4028235e+38, %v21
    %35 = vadd.xlane.f32.xlu0 %v33
    %v36 = vpop.xlane.xlu0 %35
    %v37 = vmin.f32 %v36, 3.0
    %v38 = vmul.f32 %v37, %v24
    %v39 = vadd.f32 %v38, 0.0
    %v40 = vsub.f32 3.0, %v37
    %v41 = vmax.f32 %v29, %v34
    %42 = vmax.xlane.f32.xlu0 %v41
    %v43 = vpop.xlane.xlu0 %42
    %vm44 = vcmp.eq.f32.partialorder %v29, %v43
    %v45 = vsel %vm44, 1, 0
    %v46 = vcvt.s32.f32 %v45
    %v47 = vadd.f32 %v46, 0.0
    %v48 = vsel %vm44, -3.4028235e+38, %v29
    %vm49 = vcmp.eq.f32.partialorder %v34, %v43
    %v50 = vsel %vm49, 1, 0
    %v51 = vcvt.s32.f32 %v50
    %v52 = vadd.f32 %v47, %v51
    %v53 = vsel %vm49, -3.4028235e+38, %v34
    %54 = vadd.xlane.f32.xlu0 %v52
    %v55 = vpop.xlane.xlu0 %54
    %v56 = vmin.f32 %v55, %v40
    %v57 = vmul.f32 %v56, %v43
    %v58 = vadd.f32 %v39, %v57
    %v59 = vsub.f32 %v40, %v56
    %v60 = vmax.f32 %v48, %v53
    %61 = vmax.xlane.f32.xlu0 %v60
    %v62 = vpop.xlane.xlu0 %61
    %vm63 = vcmp.eq.f32.partialorder %v48, %v62
    %v64 = vsel %vm63, 1, 0
    %v65 = vcvt.s32.f32 %v64
    %v66 = vadd.f32 %v65, 0.0
    %vm67 = vcmp.eq.f32.partialorder %v53, %v62
    %v68 = vsel %vm67, 1, 0
    %v69 = vcvt.s32.f32 %v68
    %v70 = vadd.f32 %v66, %v69
    %71 = vadd.xlane.f32.xlu0 %v70
    %v72 = vpop.xlane.xlu0 %71
    %v73 = vmin.f32 %v72, %v59
    %v74 = vmul.f32 %v73, %v62
    %v75 = vadd.f32 %v58, %v74
    %vm76 = vcmask 7168
    %77 = vst.msk [vmem:[%s1] sm:$0xff] %vm76, %v75
    // Predicated region
    $region10: #{tpu_custom_call.1} parent=1 // pred_check
      _
    $region11: #{tpu_custom_call.1} parent=1 // pred_check_branch
      %79 = sbr.rel (0) target = $region13
    $region12: #{tpu_custom_call.1} parent=1 // pred_region
      _
    $region13: #{tpu_custom_call.1} parent=1 // pred_fallthru
      _
    // Predicated region
    $region14: #{tpu_custom_call.1} parent=1 // pred_check
      _
    $region15: #{tpu_custom_call.1} parent=1 // pred_check_branch
      %81 = sbr.rel (0) target = $region17
    $region16: #{tpu_custom_call.1} parent=1 // pred_region
      _
    $region17: #{tpu_custom_call.1} parent=1 // pred_fallthru
      _
    %82 = vsyncpa [#allocation3], 1

</llo_original>
